<compile_context>
chip_gen: v5e
topology: v5e:2x2
jax: 0.10.0
libtpu: 0.0.40
codegen_flags: <defaults>
</compile_context>

<pallas_src>
from functools import partial

import jax
import jax.numpy as jnp
from jax.experimental import pallas as pl
from jax.experimental.pallas import tpu as pltpu


LANE = 128  # TPU vreg lane width; last dim of every block is kept at this.


# --------------------------- activation (shared) -----------------------------
def _apply_activation(y, activation):
    if activation == "relu":
        return jnp.maximum(y, 0.0)
    if activation == "leaky_relu":
        return jnp.where(y >= 0, y, 0.01 * y)
    if activation == "selu":
        alpha = 1.6732632423543772
        scale = 1.0507009873554805
        return scale * jnp.where(y > 0, y, alpha * (jnp.exp(y) - 1.0))
    if activation == "none":
        return y
    raise ValueError(f"unknown activation: {activation}")


# ----------------------------- Pallas kernel --------------------------------
def _residual_act_kernel(x_ref, o_ref, *, activation, compute_dtype):
    # x_ref / o_ref: (tm, LANE) lane-dense tiles.
    x = x_ref[...]
    if x.dtype != compute_dtype:
        x = x.astype(compute_dtype)
    # blocks(x) + shortcut(x); both are Identity in the reference module.
    y = _apply_activation(x + x, activation)
    o_ref[...] = y.astype(o_ref.dtype)


# --------------------------- chip / tile heuristics ---------------------------
def _tpu_generation():
    """Best-effort TPU generation from device_kind (None if unknown)."""
    try:
        kind = jax.devices()[0].device_kind.lower()
    except Exception:
        return None
    if "v2" in kind:
        return 2
    if "v3" in kind:
        return 3
    if "v4" in kind:
        return 4
    if "v5" in kind or "5e" in kind or "5p" in kind:
        return 5
    if "v6" in kind or "6e" in kind:
        return 6
    if "v7" in kind or "7x" in kind or "7" in kind:
        return 7
    return None


def _sublane_multiple(dtype_bytes):
    # Packed min-tile height: 8 for 4-byte, 16 for 2-byte, 32 for 1-byte dtypes.
    return {4: 8, 2: 16, 1: 32}.get(dtype_bytes, 8)


def _choose_row_tile(rows, dtype_bytes, gen):
    """Generation-aware row tile (multiple of the packed sublane count)."""
    sub = _sublane_multiple(dtype_bytes)
    row_bytes = LANE * dtype_bytes

    if gen is not None and gen >= 7:
        tile_cap_bytes = 8 << 20   # v7x: 3.2 TB/s HBM -> bigger tiles pay off
    elif gen == 6:
        tile_cap_bytes = 4 << 20   # v6e: ~86% roofline at 4 MiB tiles
    else:
        tile_cap_bytes = 2 << 20   # v5e / unknown: 2 MiB is already ~85%

    tm = min(rows, max(sub, tile_cap_bytes // row_bytes))

    if gen is not None and gen >= 7:
        # Two TensorCores: split only when each chunk stays >= ~1 MiB, and aim
        # for >= 4 grid steps on large inputs so both TCs stay load balanced.
        min_chunk_rows = max(sub, (1 << 20) // row_bytes)
        if rows >= 4 * min_chunk_rows:
            tm = min(tm, pl.cdiv(rows, 4))
        elif rows >= 2 * min_chunk_rows:
            tm = min(tm, pl.cdiv(rows, 2))
    # Single-TC chips (v5e/v6e): no forced split — fewest, biggest tiles win.

    tm = max(sub, (tm // sub) * sub)  # packed sublane alignment
    return tm


def _pick_compute_dtype(dtype, gen):
    d = jnp.dtype(dtype)
    if d == jnp.dtype(jnp.bfloat16):
        # Native bf16 VPU/EUP on v6e/v7x; v5e/unknown would insert casts anyway.
        return jnp.bfloat16 if (gen is not None and gen >= 6) else jnp.float32
    if d == jnp.dtype(jnp.float32):
        return jnp.float32
    return jnp.float32


# ------------------------------- wrapper --------------------------------------
def residual_block_forward(x, *, in_channels, out_channels, activation="relu",
                           force_pallas=False):
    """Forward pass of ResidualBlock(in_channels, out_channels, activation).

    blocks and shortcut are Identity in the reference module, so the math is
    activation(x + x); should_apply_shortcut (in != out channels) only routes x
    through another Identity and does not change the result.
    """
    del in_channels, out_channels  # shortcut is Identity either way (base class)
    orig_shape = x.shape
    orig_dtype = x.dtype
    total = int(x.size)
    dtype_bytes = jnp.dtype(orig_dtype).itemsize

    # Small-input fallback: pallas_call fixed overhead dwarfs ~KiB of traffic.
    if not force_pallas and total * dtype_bytes < (1 << 20):
        return _apply_activation(x + x, activation).astype(orig_dtype)

    gen = _tpu_generation()
    sub = _sublane_multiple(dtype_bytes)

    rows = pl.cdiv(total, LANE)
    padded_rows = max(rows, sub)          # guarantee at least one minimal block
    padded_total = padded_rows * LANE
    needs_pad = padded_total != total     # rare: total not a multiple of 128

    flat = x.reshape(-1)
    if needs_pad:
        flat = jnp.pad(flat, (0, padded_total - total))
    # Lane-dense slab in native layout (free reshape, no transposes).
    x2d = flat.reshape(padded_rows, LANE)

    tm = _choose_row_tile(padded_rows, dtype_bytes, gen)
    grid = pl.cdiv(padded_rows, tm)       # partial final block is fine: writes
                                          # outside the array are masked.
    tile_bytes = tm * LANE * dtype_bytes
    # in + out, each double-buffered -> ~4x tile bytes live, plus headroom.
    vmem_limit = int(min(96 << 20, max(32 << 20, 4 * tile_bytes + (8 << 20))))

    compute_dtype = _pick_compute_dtype(orig_dtype, gen)

    # TODO(synk): when the caller donates x, input_output_aliases={0: 0} would
    # save the output HBM allocation; not enabled here since x is reused below.
    out2d = pl.pallas_call(
        partial(_residual_act_kernel, activation=activation,
                compute_dtype=compute_dtype),
        out_shape=jax.ShapeDtypeStruct((padded_rows, LANE), orig_dtype),
        grid_spec=pltpu.PrefetchScalarGridSpec(
            num_scalar_prefetch=0,
            grid=(grid,),
            in_specs=[pl.BlockSpec((tm, LANE), lambda i: (i, 0))],
            out_specs=pl.BlockSpec((tm, LANE), lambda i: (i, 0)),
        ),
        compiler_params=pltpu.CompilerParams(
            dimension_semantics=("parallel",),
            vmem_limit_bytes=vmem_limit),
    )(x2d)

    if needs_pad:
        out = out2d.reshape(-1)[:total].reshape(orig_shape)
    else:
        out = out2d.reshape(orig_shape)   # free reshape, no extra HBM pass
    return out


# ------------------------------- main ----------------------------------------
if __name__ == "__main__":
    key = jax.random.PRNGKey(0)

    # ResidualBlock(in_channels=4, out_channels=4, activation='relu') on NCHW.
    N, C, H, W = 2, 4, 16, 16
    x = jax.random.normal(key, (N, C, H, W), dtype=jnp.float32)
    out = residual_block_forward(x, in_channels=C, out_channels=C,
                                 activation="relu", force_pallas=True)
    out = jax.block_until_ready(out)
    ref = jnp.maximum(x + x, 0.0)
    assert out.shape == (N, C, H, W)
    assert out.dtype == x.dtype
    assert jnp.allclose(out, ref, atol=1e-6, rtol=1e-6)

    # Rare pad path (total not a multiple of 128) + leaky_relu; in != out
    # channels only routes x through another Identity in the base class.
    x2 = jax.random.normal(jax.random.fold_in(key, 1), (2, 3, 5, 7),
                           dtype=jnp.float32)
    out2 = residual_block_forward(x2, in_channels=3, out_channels=8,
                                  activation="leaky_relu", force_pallas=True)
    out2 = jax.block_until_ready(out2)
    y2 = x2 + x2
    ref2 = jnp.where(y2 >= 0, y2, 0.01 * y2)
    assert out2.shape == x2.shape
    assert jnp.allclose(out2, ref2, atol=1e-6, rtol=1e-6)

    # bf16 path (native bf16 compute on v6e/v7x, f32 upcast on v5e/unknown).
    x3 = jax.random.normal(jax.random.fold_in(key, 2), (N, C, H, W),
                           dtype=jnp.bfloat16)
    out3 = residual_block_forward(x3, in_channels=C, out_channels=C,
                                  activation="relu", force_pallas=True)
    out3 = jax.block_until_ready(out3)
    ref3 = jnp.maximum(x3 + x3, jnp.zeros((), jnp.bfloat16))
    assert out3.dtype == jnp.bfloat16
    assert jnp.allclose(out3.astype(jnp.float32), ref3.astype(jnp.float32))

    # Small-input fallback path (no pallas_call) must match too.
    out4 = residual_block_forward(x, in_channels=C, out_channels=C,
                                  activation="relu")
    out4 = jax.block_until_ready(out4)
    assert jnp.allclose(out4, ref, atol=1e-6, rtol=1e-6)

    print("KERNEL_OK")
</pallas_src>

<mosaic_0001>
module attributes {stable_mosaic.version = 11 : i64} {
  func.func @_residual_act_kernel(%arg0: i32, %arg1: memref<16x128xf32, #tpu.memory_space<vmem>>, %arg2: memref<16x128xf32, #tpu.memory_space<vmem>>) attributes {dimension_semantics = [#tpu.dimension_semantics<parallel>], iteration_bounds = array<i64: 1>, scalar_prefetch = 0 : i64, scratch_operands = 0 : i64, tpu.core_type = #tpu.core_type<tc>, window_params = [{transform_indices = @transform_0, window_bounds = array<i64: 16, 128>}, {transform_indices = @transform_1, window_bounds = array<i64: 16, 128>}]} {
    %c0 = arith.constant 0 : index
    %c0_0 = arith.constant 0 : index
    %0 = vector.load %arg1[%c0, %c0_0] : memref<16x128xf32, #tpu.memory_space<vmem>>, vector<16x128xf32>
    %1 = arith.addf %0, %0 : vector<16x128xf32>
    %cst = arith.constant 0.000000e+00 : f32
    %2 = vector.broadcast %cst : f32 to vector<16x128xf32>
    %3 = arith.maximumf %1, %2 : vector<16x128xf32>
    %c0_1 = arith.constant 0 : index
    %c0_2 = arith.constant 0 : index
    %4 = vector.load %arg2[%c0_1, %c0_2] : memref<16x128xf32, #tpu.memory_space<vmem>>, vector<16x128xf32>
    tpu.vector_store %arg2[%c0_1, %c0_2], %3 {strides = array<i32>} : memref<16x128xf32, #tpu.memory_space<vmem>>, vector<16x128xf32>,
    return
  }
  func.func @transform_0(%arg0: i32) -> (i32, i32) {
    %c0_i32 = arith.constant 0 : i32
    %c0_i32_0 = arith.constant 0 : i32
    return %arg0, %c0_i32 : i32, i32
  }
  func.func @transform_1(%arg0: i32) -> (i32, i32) {
    %c0_i32 = arith.constant 0 : i32
    %c0_i32_0 = arith.constant 0 : i32
    return %arg0, %c0_i32 : i32, i32
  }
}

</mosaic_0001>

<llo_original>
// kernel: tpu_custom_call.1
$region0: #{tpu_custom_call.1}
  #allocation0 [shape = 'u32[]', space=smem, size = 0x4, offset = 0x4, fixed_abs, tag = 'smem constant byte address 0x4 - core index']
  #allocation1 [shape = 'u32[72,128]{1,0:T(1,128)}', space=vmem, size = 0x9000, scoped, tag = 'internal scratch']
  %s0 = inlined_call_operand.hbm [shape: f32[16,128], index: 0, kind: input, shape index: {}]
  %s1 = inlined_call_operand.hbm [shape: f32[16,128], index: 1, kind: output, shape index: {}]
  %s2 = sld [smem:[#allocation0]]
  $region18: #{tpu_custom_call.1} parent=0
    _
  %s4 = ssub.s32 1, %s2
  %s5 = scalar_select 0, %s4, %s2
  $region1: #{tpu_custom_call.1} parent=0
    #allocation2 [shape = 'u8[8192]{0}', space=vmem, size = 0x2000, scoped, tag = 'input window, operand 0, single buffered']
    #allocation3 [shape = 's32[1]{0}', space=sflag, size = 0x4, scoped, tag = 'scoped memory for tpu_custom_call.1']
    #allocation4 [shape = 's32[1]{0}', space=sflag, size = 0x4, scoped, tag = 'scoped memory for tpu_custom_call.1']
    #allocation5 [shape = 'u8[8192]{0}', space=vmem, size = 0x2000, scoped, tag = 'output window, operand 0, single buffered']
    %6 = vsyncpa [#allocation3], 0
    %7 = vsyncpa [#allocation4], 0
    // Predicated region
    $region2: #{tpu_custom_call.1} parent=1 // pred_check
      _
    $region3: #{tpu_custom_call.1} parent=1 // pred_check_branch
      %9 = sbr.rel (0) target = $region5
    $region4: #{tpu_custom_call.1} parent=1 // pred_region
      %11 = vsyncadd [#allocation3], 0
      %s12 = sshll.u32 %s0, 4
      %s13 = int_to_ptr.hbm [resolvable:$true] %s12
      %s14 = sshll.u32 [#allocation2], 4
      %s15 = int_to_ptr.vmem [resolvable:$true] %s14
      %20 = dma.hbm_to_vmem [thread:$0]  %s13, 256, %s15, [#allocation3], 128, 128, 8
    $region5: #{tpu_custom_call.1} parent=1 // pred_fallthru
      _
    // Predicated region
    $region6: #{tpu_custom_call.1} parent=1 // pred_check
      _
    $region7: #{tpu_custom_call.1} parent=1 // pred_check_branch
      %22 = sbr.rel (0) target = $region9
    $region8: #{tpu_custom_call.1} parent=1 // pred_region
      %24 = dma.done [#allocation3], 256
    $region9: #{tpu_custom_call.1} parent=1 // pred_fallthru
      _
    %v25 = vld [vmem:[#allocation2] sm:$0xff]
    %v26 = vld [vmem:[#allocation2 + $0x8] sm:$0xff]
    %v27 = vadd.f32 %v25, %v25
    %v28 = vadd.f32 %v26, %v26
    %v29 = vmax.f32 %v27, 0.0
    %v30 = vmax.f32 %v28, 0.0
    %31 = vst [vmem:[#allocation5] sm:$0xff] %v29
    %32 = vst [vmem:[#allocation5 + $0x8] sm:$0xff] %v30
    // Predicated region
    $region10: #{tpu_custom_call.1} parent=1 // pred_check
      _
    $region11: #{tpu_custom_call.1} parent=1 // pred_check_branch
      %34 = sbr.rel (0) target = $region13
    $region12: #{tpu_custom_call.1} parent=1 // pred_region
      %36 = vsyncadd [#allocation4], 0
      %s37 = sshll.u32 [#allocation5], 4
      %s38 = int_to_ptr.vmem [resolvable:$true] %s37
      %s39 = sshll.u32 %s1, 4
      %s40 = int_to_ptr.hbm [resolvable:$true] %s39
      %45 = dma.vmem_to_hbm [thread:$0]  %s38, 256, %s40, [#allocation4], 128, 128, 8
    $region13: #{tpu_custom_call.1} parent=1 // pred_fallthru
      _
    // Predicated region
    $region14: #{tpu_custom_call.1} parent=1 // pred_check
      _
    $region15: #{tpu_custom_call.1} parent=1 // pred_check_branch
      %47 = sbr.rel (0) target = $region17
    $region16: #{tpu_custom_call.1} parent=1 // pred_region
      %49 = dma.done [#allocation4], 256
    $region17: #{tpu_custom_call.1} parent=1 // pred_fallthru
      _
    %50 = vsyncpa [#allocation3], 1
    %51 = vsyncpa [#allocation4], 1

</llo_original>
